<compile_context>
chip_gen: v7x
topology: tpu7x:2x2x1
jax: 0.10.0
libtpu: 0.0.40
codegen_flags: <defaults>
</compile_context>

<pallas_src>
import functools

import jax
import jax.numpy as jnp
from jax.experimental import pallas as pl
from jax.experimental.pallas import tpu as pltpu


def _round_up(n: int, m: int) -> int:
    return (n + m - 1) // m * m


def _pad_dim(n: int) -> int:
    # Lane-dense padding only when it pays off: large dims that are not already
    # multiples of 128.  Small dims (<=128) pass through unchanged; padding
    # them only inflates weight DMA / MXU columns / output writeback.
    if n <= 128 or n % 128 == 0:
        return n
    return _round_up(n, 128)


def _pad2(a, rows: int, cols: int):
    r, c = a.shape
    if (r, c) == (rows, cols):
        return a
    return jnp.pad(a, ((0, rows - r), (0, cols - c)))


def prepare_ffn_params(w1, b1, w2, b2, w3, b3, compute_dtype=jnp.bfloat16):
    """One-time weight prep (hoisted out of the per-call path).

    Defensively reshapes PyTorch-style 1-D biases to (1, n), conditionally pads
    feature dims to multiples of 128, and casts matmul operands to the compute
    dtype (bf16 by default; pass jnp.float32 for exact-precision mode).
    Zero padding is exact: padded x columns hit zero weight rows, padded hidden
    units get zero weights + zero bias (ReLU(0)=0), padded outputs are sliced
    off in ffn_forward.
    """
    w1, w2, w3 = (jnp.asarray(w) for w in (w1, w2, w3))
    b1, b2, b3 = (jnp.asarray(b).reshape(1, -1) for b in (b1, b2, b3))

    D, H1 = w1.shape
    H2 = w2.shape[1]
    O = w3.shape[1]
    assert w2.shape[0] == H1 and w3.shape[0] == H2
    Dp, H1p, H2p, Op = map(_pad_dim, (D, H1, H2, O))

    params = (
        _pad2(w1, Dp, H1p).astype(compute_dtype),
        _pad2(b1, 1, H1p).astype(jnp.float32),
        _pad2(w2, H1p, H2p).astype(compute_dtype),
        _pad2(b2, 1, H2p).astype(jnp.float32),
        _pad2(w3, H2p, Op).astype(compute_dtype),
        _pad2(b3, 1, Op).astype(jnp.float32),
    )
    return params, O


def _ffn_kernel(x_ref, w1_ref, b1_ref, w2_ref, b2_ref, w3_ref, b3_ref, o_ref):
    # Fused Linear -> ReLU -> Linear -> ReLU -> Linear.  Dropout is identity at
    # inference.  Matmul operands in the compute dtype on the MXU with f32
    # accumulation; bias add / ReLU stay f32 on the VPU.
    # TODO(synk): training-mode dropout (pltpu.prng_* masking) not implemented.
    x = x_ref[...].astype(w1_ref.dtype)
    h = jnp.dot(x, w1_ref[...], preferred_element_type=jnp.float32)
    h = jnp.maximum(h + b1_ref[...], 0.0).astype(w2_ref.dtype)
    h = jnp.dot(h, w2_ref[...], preferred_element_type=jnp.float32)
    h = jnp.maximum(h + b2_ref[...], 0.0).astype(w3_ref.dtype)
    o = jnp.dot(h, w3_ref[...], preferred_element_type=jnp.float32)
    o_ref[...] = (o + b3_ref[...]).astype(o_ref.dtype)


def _default_tile_m() -> int:
    try:
        kind = jax.devices()[0].device_kind.lower()
    except Exception:
        return 256
    # v5e MXU is 4x128^2: tm=128 already fills MXU rows and halves tile VMEM.
    if "v5 lite" in kind or "v5e" in kind or "v5litepod" in kind:
        return 128
    return 256


@functools.partial(
    jax.jit,
    static_argnames=("out_features", "tile_m", "single_buffer_weights"))
def ffn_forward(x, w1p, b1p, w2p, b2p, w3p, b3p, *, out_features,
                tile_m=None, single_buffer_weights=True):
    B, D = x.shape
    Dp, H1p = w1p.shape
    H2p, Op = w3p.shape
    assert D <= Dp and w2p.shape == (H1p, H2p)

    if tile_m is None:
        tile_m = _default_tile_m()

    # Balanced batch tiling (multiples of 16 for bf16-friendly sublane packing
    # on large batches; the whole batch in one tile when it is small).
    if B > tile_m:
        n_steps = pl.cdiv(B, tile_m)
        tm = _round_up(pl.cdiv(B, n_steps), 16)
    elif B >= 32:
        tm = _round_up(pl.cdiv(B, 2), 16)   # >=2 steps so both v7x TCs get work
    else:
        tm = _round_up(B, 8)
    Bp = _round_up(B, tm)

    if Bp != B or Dp != D:
        x = jnp.pad(x, ((0, Bp - B), (0, Dp - D)))

    cbytes = jnp.dtype(w1p.dtype).itemsize
    xbytes = jnp.dtype(x.dtype).itemsize
    weight_bytes = (Dp * H1p + H1p * H2p + H2p * Op) * cbytes
    bias_bytes = (H1p + H2p + Op) * 4
    io_bytes = 2 * tm * Dp * xbytes + 2 * tm * Op * 4
    interm_bytes = 2 * tm * max(H1p, H2p) * (4 + cbytes)
    wmult = 1 if single_buffer_weights else 2
    # TODO(synk): K-tiled fallback (grid axis over hidden chunks marked
    # "arbitrary", streamed weight tiles, f32 accumulator scratch with pl.when
    # init/finalize) once wmult*weight_bytes exceeds the VMEM budget -- needed
    # ~2x earlier on v7x (64 MiB) than on v5e/v6e (128 MiB).
    # TODO(synk): optional fp8 (v7x) / int8 (v5e/v6e) weight quantization with
    # per-channel scales for very large hidden sizes.
    vmem_needed = wmult * (weight_bytes + bias_bytes) + io_bytes + interm_bytes
    vmem_limit = int(min(100 << 20, max(16 << 20, 2 * vmem_needed + (4 << 20))))

    cost = pl.CostEstimate(
        flops=2 * Bp * (Dp * H1p + H1p * H2p + H2p * Op),
        transcendentals=0,
        bytes_accessed=Bp * Dp * xbytes + weight_bytes + bias_bytes
        + Bp * Op * 4,
    )

    if single_buffer_weights:
        # Constant index_map => double-buffering these blocks is pure VMEM waste.
        def const_spec(shape):
            return pl.BlockSpec(shape, lambda i: (0,) * len(shape),
                                pipeline_mode=pl.Buffered(1))
    else:
        def const_spec(shape):
            return pl.BlockSpec(shape, lambda i: (0,) * len(shape))

    grid = (Bp // tm,)
    out = pl.pallas_call(
        _ffn_kernel,
        out_shape=jax.ShapeDtypeStruct((Bp, Op), jnp.float32),
        grid_spec=pl.GridSpec(
            grid=grid,
            in_specs=[
                pl.BlockSpec((tm, Dp), lambda i: (i, 0)),   # x tile (pipelined)
                const_spec((Dp, H1p)),                      # W1 (VMEM resident)
                const_spec((1, H1p)),                       # b1
                const_spec((H1p, H2p)),                     # W2 (VMEM resident)
                const_spec((1, H2p)),                       # b2
                const_spec((H2p, Op)),                      # W3 (VMEM resident)
                const_spec((1, Op)),                        # b3
            ],
            out_specs=pl.BlockSpec((tm, Op), lambda i: (i, 0)),
        ),
        compiler_params=pltpu.CompilerParams(
            dimension_semantics=("parallel",),
            vmem_limit_bytes=vmem_limit),
        cost_estimate=cost,
    )(x, w1p, b1p, w2p, b2p, w3p, b3p)

    if Bp != B or Op != out_features:
        out = out[:B, :out_features]
    return out


def xavier_normal(key, shape):
    fan_in, fan_out = shape
    std = (2.0 / (fan_in + fan_out)) ** 0.5
    return std * jax.random.normal(key, shape, dtype=jnp.float32)


if __name__ == "__main__":
    # args-equivalent config: ffn_num_layers=3, ffn_hidden_size=32, num_tasks=4,
    # dataset_type='regression', features_only=False, use_input_features=False
    #   => first_linear_dim = ffn_hidden_size = 32.
    batch = 8
    first_linear_dim = 32
    ffn_hidden_size = 32
    output_size = 4

    key = jax.random.PRNGKey(0)
    kx, k1, k2, k3 = jax.random.split(key, 4)

    x = jax.random.normal(kx, (batch, first_linear_dim), dtype=jnp.float32)

    # initialize_weights: xavier_normal for matrices, zeros for 1-D (bias).
    w1 = xavier_normal(k1, (first_linear_dim, ffn_hidden_size))
    b1 = jnp.zeros((ffn_hidden_size,), dtype=jnp.float32)
    w2 = xavier_normal(k2, (ffn_hidden_size, ffn_hidden_size))
    b2 = jnp.zeros((ffn_hidden_size,), dtype=jnp.float32)
    w3 = xavier_normal(k3, (ffn_hidden_size, output_size))
    b3 = jnp.zeros((output_size,), dtype=jnp.float32)

    # One-time weight prep (padding + compute-dtype cast), hoisted out of the
    # per-call path.
    params, out_features = prepare_ffn_params(w1, b1, w2, b2, w3, b3)

    def run(single_buffer: bool):
        y = ffn_forward(x, *params, out_features=out_features,
                        single_buffer_weights=single_buffer)
        jax.block_until_ready(y)
        return y

    try:
        out = run(True)      # single-buffered (pl.Buffered(1)) resident weights
    except Exception:
        out = run(False)     # fall back to default double-buffering

    assert out.shape == (batch, output_size)

    # Reference mirroring the kernel numerics (bf16 operands, f32 accumulation,
    # f32 bias add / ReLU).
    def _bf(a):
        return a.astype(jnp.bfloat16).astype(jnp.float32)

    b1r, b2r, b3r = b1.reshape(1, -1), b2.reshape(1, -1), b3.reshape(1, -1)
    ref = jnp.maximum(_bf(x) @ _bf(w1) + b1r, 0.0)
    ref = jnp.maximum(_bf(ref) @ _bf(w2) + b2r, 0.0)
    ref = _bf(ref) @ _bf(w3) + b3r
    assert jnp.allclose(out, ref, atol=2e-3, rtol=2e-3), (
        float(jnp.max(jnp.abs(out - ref))))

    # Loose sanity check against the pure-f32 reference.
    ref32 = jnp.maximum(x @ w1 + b1r, 0.0)
    ref32 = jnp.maximum(ref32 @ w2 + b2r, 0.0)
    ref32 = ref32 @ w3 + b3r
    assert jnp.allclose(out, ref32, atol=5e-2, rtol=5e-2)

    print("KERNEL_OK")
</pallas_src>

<mosaic_0001>
module attributes {stable_mosaic.version = 11 : i64} {
  func.func @_ffn_kernel(%arg0: i32, %arg1: memref<8x32xf32, #tpu.memory_space<vmem>>, %arg2: memref<32x32xbf16, #tpu.memory_space<vmem>>, %arg3: memref<1x32xf32, #tpu.memory_space<vmem>>, %arg4: memref<32x32xbf16, #tpu.memory_space<vmem>>, %arg5: memref<1x32xf32, #tpu.memory_space<vmem>>, %arg6: memref<32x4xbf16, #tpu.memory_space<vmem>>, %arg7: memref<1x4xf32, #tpu.memory_space<vmem>>, %arg8: memref<8x4xf32, #tpu.memory_space<vmem>>) attributes {dimension_semantics = [#tpu.dimension_semantics<parallel>], iteration_bounds = array<i64: 1>, scalar_prefetch = 0 : i64, scratch_operands = 0 : i64, tpu.core_type = #tpu.core_type<tc>, window_params = [{transform_indices = @transform_0, window_bounds = array<i64: 8, 32>}, {pipeline_mode = #tpu.pipeline_mode<synchronous>, transform_indices = @transform_1, window_bounds = array<i64: 32, 32>}, {pipeline_mode = #tpu.pipeline_mode<synchronous>, transform_indices = @transform_2, window_bounds = array<i64: 1, 32>}, {pipeline_mode = #tpu.pipeline_mode<synchronous>, transform_indices = @transform_3, window_bounds = array<i64: 32, 32>}, {pipeline_mode = #tpu.pipeline_mode<synchronous>, transform_indices = @transform_4, window_bounds = array<i64: 1, 32>}, {pipeline_mode = #tpu.pipeline_mode<synchronous>, transform_indices = @transform_5, window_bounds = array<i64: 32, 4>}, {pipeline_mode = #tpu.pipeline_mode<synchronous>, transform_indices = @transform_6, window_bounds = array<i64: 1, 4>}, {transform_indices = @transform_7, window_bounds = array<i64: 8, 4>}]} {
    %c0 = arith.constant 0 : index
    %c0_0 = arith.constant 0 : index
    %0 = vector.load %arg1[%c0, %c0_0] : memref<8x32xf32, #tpu.memory_space<vmem>>, vector<8x32xf32>
    %1 = arith.truncf %0 : vector<8x32xf32> to vector<8x32xbf16>
    %c0_1 = arith.constant 0 : index
    %c0_2 = arith.constant 0 : index
    %2 = vector.load %arg2[%c0_1, %c0_2] : memref<32x32xbf16, #tpu.memory_space<vmem>>, vector<32x32xbf16>
    %cst = arith.constant dense<0.000000e+00> : vector<8x32xf32>
    %3 = tpu.matmul %1, %2, %cst {dimension_numbers = #tpu.dot_dimension_numbers<[1], [0], [0], [1], [0, 0, 1, 1], [], []>} : vector<8x32xbf16>, vector<32x32xbf16>, vector<8x32xf32> -> vector<8x32xf32>
    %c0_3 = arith.constant 0 : index
    %c0_4 = arith.constant 0 : index
    %4 = vector.load %arg3[%c0_3, %c0_4] : memref<1x32xf32, #tpu.memory_space<vmem>>, vector<1x32xf32>
    %5 = vector.broadcast %4 : vector<1x32xf32> to vector<8x32xf32>
    %6 = arith.addf %3, %5 : vector<8x32xf32>
    %cst_5 = arith.constant 0.000000e+00 : f32
    %7 = vector.broadcast %cst_5 : f32 to vector<8x32xf32>
    %8 = arith.maximumf %6, %7 : vector<8x32xf32>
    %9 = arith.truncf %8 : vector<8x32xf32> to vector<8x32xbf16>
    %c0_6 = arith.constant 0 : index
    %c0_7 = arith.constant 0 : index
    %10 = vector.load %arg4[%c0_6, %c0_7] : memref<32x32xbf16, #tpu.memory_space<vmem>>, vector<32x32xbf16>
    %cst_8 = arith.constant dense<0.000000e+00> : vector<8x32xf32>
    %11 = tpu.matmul %9, %10, %cst_8 {dimension_numbers = #tpu.dot_dimension_numbers<[1], [0], [0], [1], [0, 0, 1, 1], [], []>} : vector<8x32xbf16>, vector<32x32xbf16>, vector<8x32xf32> -> vector<8x32xf32>
    %c0_9 = arith.constant 0 : index
    %c0_10 = arith.constant 0 : index
    %12 = vector.load %arg5[%c0_9, %c0_10] : memref<1x32xf32, #tpu.memory_space<vmem>>, vector<1x32xf32>
    %13 = vector.broadcast %12 : vector<1x32xf32> to vector<8x32xf32>
    %14 = arith.addf %11, %13 : vector<8x32xf32>
    %cst_11 = arith.constant 0.000000e+00 : f32
    %15 = vector.broadcast %cst_11 : f32 to vector<8x32xf32>
    %16 = arith.maximumf %14, %15 : vector<8x32xf32>
    %17 = arith.truncf %16 : vector<8x32xf32> to vector<8x32xbf16>
    %c0_12 = arith.constant 0 : index
    %c0_13 = arith.constant 0 : index
    %18 = vector.load %arg6[%c0_12, %c0_13] : memref<32x4xbf16, #tpu.memory_space<vmem>>, vector<32x4xbf16>
    %cst_14 = arith.constant dense<0.000000e+00> : vector<8x4xf32>
    %19 = tpu.matmul %17, %18, %cst_14 {dimension_numbers = #tpu.dot_dimension_numbers<[1], [0], [0], [1], [0, 0, 1, 1], [], []>} : vector<8x32xbf16>, vector<32x4xbf16>, vector<8x4xf32> -> vector<8x4xf32>
    %c0_15 = arith.constant 0 : index
    %c0_16 = arith.constant 0 : index
    %20 = vector.load %arg7[%c0_15, %c0_16] : memref<1x4xf32, #tpu.memory_space<vmem>>, vector<1x4xf32>
    %21 = vector.broadcast %20 : vector<1x4xf32> to vector<8x4xf32>
    %22 = arith.addf %19, %21 : vector<8x4xf32>
    %c0_17 = arith.constant 0 : index
    %c0_18 = arith.constant 0 : index
    %23 = vector.load %arg8[%c0_17, %c0_18] : memref<8x4xf32, #tpu.memory_space<vmem>>, vector<8x4xf32>
    tpu.vector_store %arg8[%c0_17, %c0_18], %22 {strides = array<i32>} : memref<8x4xf32, #tpu.memory_space<vmem>>, vector<8x4xf32>,
    return
  }
  func.func @transform_0(%arg0: i32) -> (i32, i32) {
    %c0_i32 = arith.constant 0 : i32
    %c0_i32_0 = arith.constant 0 : i32
    return %arg0, %c0_i32 : i32, i32
  }
  func.func @transform_1(%arg0: i32) -> (i32, i32) {
    %c0_i32 = arith.constant 0 : i32
    %c0_i32_0 = arith.constant 0 : i32
    %c0_i32_1 = arith.constant 0 : i32
    return %c0_i32, %c0_i32_0 : i32, i32
  }
  func.func @transform_2(%arg0: i32) -> (i32, i32) {
    %c0_i32 = arith.constant 0 : i32
    %c0_i32_0 = arith.constant 0 : i32
    %c0_i32_1 = arith.constant 0 : i32
    return %c0_i32, %c0_i32_0 : i32, i32
  }
  func.func @transform_3(%arg0: i32) -> (i32, i32) {
    %c0_i32 = arith.constant 0 : i32
    %c0_i32_0 = arith.constant 0 : i32
    %c0_i32_1 = arith.constant 0 : i32
    return %c0_i32, %c0_i32_0 : i32, i32
  }
  func.func @transform_4(%arg0: i32) -> (i32, i32) {
    %c0_i32 = arith.constant 0 : i32
    %c0_i32_0 = arith.constant 0 : i32
    %c0_i32_1 = arith.constant 0 : i32
    return %c0_i32, %c0_i32_0 : i32, i32
  }
  func.func @transform_5(%arg0: i32) -> (i32, i32) {
    %c0_i32 = arith.constant 0 : i32
    %c0_i32_0 = arith.constant 0 : i32
    %c0_i32_1 = arith.constant 0 : i32
    return %c0_i32, %c0_i32_0 : i32, i32
  }
  func.func @transform_6(%arg0: i32) -> (i32, i32) {
    %c0_i32 = arith.constant 0 : i32
    %c0_i32_0 = arith.constant 0 : i32
    %c0_i32_1 = arith.constant 0 : i32
    return %c0_i32, %c0_i32_0 : i32, i32
  }
  func.func @transform_7(%arg0: i32) -> (i32, i32) {
    %c0_i32 = arith.constant 0 : i32
    %c0_i32_0 = arith.constant 0 : i32
    return %arg0, %c0_i32 : i32, i32
  }
}

module attributes {stable_mosaic.version = 11 : i64} {
  func.func @_ffn_kernel(%arg0: i32, %arg1: memref<8x32xf32, #tpu.memory_space<vmem>>, %arg2: memref<32x32xbf16, #tpu.memory_space<vmem>>, %arg3: memref<1x32xf32, #tpu.memory_space<vmem>>, %arg4: memref<32x32xbf16, #tpu.memory_space<vmem>>, %arg5: memref<1x32xf32, #tpu.memory_space<vmem>>, %arg6: memref<32x4xbf16, #tpu.memory_space<vmem>>, %arg7: memref<1x4xf32, #tpu.memory_space<vmem>>, %arg8: memref<8x4xf32, #tpu.memory_space<vmem>>) attributes {dimension_semantics = [#tpu.dimension_semantics<parallel>], iteration_bounds = array<i64: 1>, scalar_prefetch = 0 : i64, scratch_operands = 0 : i64, tpu.core_type = #tpu.core_type<tc>, window_params = [{transform_indices = @transform_0, window_bounds = array<i64: 8, 32>}, {pipeline_mode = #tpu.pipeline_mode<synchronous>, transform_indices = @transform_1, window_bounds = array<i64: 32, 32>}, {pipeline_mode = #tpu.pipeline_mode<synchronous>, transform_indices = @transform_2, window_bounds = array<i64: 1, 32>}, {pipeline_mode = #tpu.pipeline_mode<synchronous>, transform_indices = @transform_3, window_bounds = array<i64: 32, 32>}, {pipeline_mode = #tpu.pipeline_mode<synchronous>, transform_indices = @transform_4, window_bounds = array<i64: 1, 32>}, {pipeline_mode = #tpu.pipeline_mode<synchronous>, transform_indices = @transform_5, window_bounds = array<i64: 32, 4>}, {pipeline_mode = #tpu.pipeline_mode<synchronous>, transform_indices = @transform_6, window_bounds = array<i64: 1, 4>}, {transform_indices = @transform_7, window_bounds = array<i64: 8, 4>}]} {
    %c0 = arith.constant 0 : index
    %c0_0 = arith.constant 0 : index
    %0 = vector.load %arg1[%c0, %c0_0] : memref<8x32xf32, #tpu.memory_space<vmem>>, vector<8x32xf32>
    %1 = arith.truncf %0 : vector<8x32xf32> to vector<8x32xbf16>
    %c0_1 = arith.constant 0 : index
    %c0_2 = arith.constant 0 : index
    %2 = vector.load %arg2[%c0_1, %c0_2] : memref<32x32xbf16, #tpu.memory_space<vmem>>, vector<32x32xbf16>
    %cst = arith.constant dense<0.000000e+00> : vector<8x32xf32>
    %3 = tpu.matmul %1, %2, %cst {dimension_numbers = #tpu.dot_dimension_numbers<[1], [0], [0], [1], [0, 0, 1, 1], [], []>} : vector<8x32xbf16>, vector<32x32xbf16>, vector<8x32xf32> -> vector<8x32xf32>
    %c0_3 = arith.constant 0 : index
    %c0_4 = arith.constant 0 : index
    %4 = vector.load %arg3[%c0_3, %c0_4] : memref<1x32xf32, #tpu.memory_space<vmem>>, vector<1x32xf32>
    %5 = vector.broadcast %4 : vector<1x32xf32> to vector<8x32xf32>
    %6 = arith.addf %3, %5 : vector<8x32xf32>
    %cst_5 = arith.constant 0.000000e+00 : f32
    %7 = vector.broadcast %cst_5 : f32 to vector<8x32xf32>
    %8 = arith.maximumf %6, %7 : vector<8x32xf32>
    %9 = arith.truncf %8 : vector<8x32xf32> to vector<8x32xbf16>
    %c0_6 = arith.constant 0 : index
    %c0_7 = arith.constant 0 : index
    %10 = vector.load %arg4[%c0_6, %c0_7] : memref<32x32xbf16, #tpu.memory_space<vmem>>, vector<32x32xbf16>
    %cst_8 = arith.constant dense<0.000000e+00> : vector<8x32xf32>
    %11 = tpu.matmul %9, %10, %cst_8 {dimension_numbers = #tpu.dot_dimension_numbers<[1], [0], [0], [1], [0, 0, 1, 1], [], []>} : vector<8x32xbf16>, vector<32x32xbf16>, vector<8x32xf32> -> vector<8x32xf32>
    %c0_9 = arith.constant 0 : index
    %c0_10 = arith.constant 0 : index
    %12 = vector.load %arg5[%c0_9, %c0_10] : memref<1x32xf32, #tpu.memory_space<vmem>>, vector<1x32xf32>
    %13 = vector.broadcast %12 : vector<1x32xf32> to vector<8x32xf32>
    %14 = arith.addf %11, %13 : vector<8x32xf32>
    %cst_11 = arith.constant 0.000000e+00 : f32
    %15 = vector.broadcast %cst_11 : f32 to vector<8x32xf32>
    %16 = arith.maximumf %14, %15 : vector<8x32xf32>
    %17 = arith.truncf %16 : vector<8x32xf32> to vector<8x32xbf16>
    %c0_12 = arith.constant 0 : index
    %c0_13 = arith.constant 0 : index
    %18 = vector.load %arg6[%c0_12, %c0_13] : memref<32x4xbf16, #tpu.memory_space<vmem>>, vector<32x4xbf16>
    %cst_14 = arith.constant dense<0.000000e+00> : vector<8x4xf32>
    %19 = tpu.matmul %17, %18, %cst_14 {dimension_numbers = #tpu.dot_dimension_numbers<[1], [0], [0], [1], [0, 0, 1, 1], [], []>} : vector<8x32xbf16>, vector<32x4xbf16>, vector<8x4xf32> -> vector<8x4xf32>
    %c0_15 = arith.constant 0 : index
    %c0_16 = arith.constant 0 : index
    %20 = vector.load %arg7[%c0_15, %c0_16] : memref<1x4xf32, #tpu.memory_space<vmem>>, vector<1x4xf32>
    %21 = vector.broadcast %20 : vector<1x4xf32> to vector<8x4xf32>
    %22 = arith.addf %19, %21 : vector<8x4xf32>
    %c0_17 = arith.constant 0 : index
    %c0_18 = arith.constant 0 : index
    %23 = vector.load %arg8[%c0_17, %c0_18] : memref<8x4xf32, #tpu.memory_space<vmem>>, vector<8x4xf32>
    tpu.vector_store %arg8[%c0_17, %c0_18], %22 {strides = array<i32>} : memref<8x4xf32, #tpu.memory_space<vmem>>, vector<8x4xf32>,
    return
  }
  func.func @transform_0(%arg0: i32) -> (i32, i32) {
    %c0_i32 = arith.constant 0 : i32
    %c0_i32_0 = arith.constant 0 : i32
    return %arg0, %c0_i32 : i32, i32
  }
  func.func @transform_1(%arg0: i32) -> (i32, i32) {
    %c0_i32 = arith.constant 0 : i32
    %c0_i32_0 = arith.constant 0 : i32
    %c0_i32_1 = arith.constant 0 : i32
    return %c0_i32, %c0_i32_0 : i32, i32
  }
  func.func @transform_2(%arg0: i32) -> (i32, i32) {
    %c0_i32 = arith.constant 0 : i32
    %c0_i32_0 = arith.constant 0 : i32
    %c0_i32_1 = arith.constant 0 : i32
    return %c0_i32, %c0_i32_0 : i32, i32
  }
  func.func @transform_3(%arg0: i32) -> (i32, i32) {
    %c0_i32 = arith.constant 0 : i32
    %c0_i32_0 = arith.constant 0 : i32
    %c0_i32_1 = arith.constant 0 : i32
    return %c0_i32, %c0_i32_0 : i32, i32
  }
  func.func @transform_4(%arg0: i32) -> (i32, i32) {
    %c0_i32 = arith.constant 0 : i32
    %c0_i32_0 = arith.constant 0 : i32
    %c0_i32_1 = arith.constant 0 : i32
    return %c0_i32, %c0_i32_0 : i32, i32
  }
  func.func @transform_5(%arg0: i32) -> (i32, i32) {
    %c0_i32 = arith.constant 0 : i32
    %c0_i32_0 = arith.constant 0 : i32
    %c0_i32_1 = arith.constant 0 : i32
    return %c0_i32, %c0_i32_0 : i32, i32
  }
  func.func @transform_6(%arg0: i32) -> (i32, i32) {
    %c0_i32 = arith.constant 0 : i32
    %c0_i32_0 = arith.constant 0 : i32
    %c0_i32_1 = arith.constant 0 : i32
    return %c0_i32, %c0_i32_0 : i32, i32
  }
  func.func @transform_7(%arg0: i32) -> (i32, i32) {
    %c0_i32 = arith.constant 0 : i32
    %c0_i32_0 = arith.constant 0 : i32
    return %arg0, %c0_i32 : i32, i32
  }
}

</mosaic_0001>

<llo_original>
// kernel: ffn_forward.1
$region0: #{ffn_forward.1}
  #allocation0 [shape = 'u32[]', space=smem, size = 0x4, offset = 0x4, fixed_abs, tag = 'smem constant byte address 0x4 - core index']
  #allocation1 [shape = 'u32[144,128]{1,0:T(1,128)}', space=vmem, size = 0x12000, scoped, tag = 'internal scratch']
  %s0 = inlined_call_operand.hbm [shape: f32[8,32], index: 0, kind: input, shape index: {}]
  %s1 = inlined_call_operand.vmem [shape: bf16[32,32], index: 1, kind: input, shape index: {}]
  %s2 = inlined_call_operand.vmem [shape: f32[1,32], index: 2, kind: input, shape index: {}]
  %s3 = inlined_call_operand.hbm [shape: bf16[32,32], index: 3, kind: input, shape index: {}]
  %s4 = inlined_call_operand.vmem [shape: f32[1,32], index: 4, kind: input, shape index: {}]
  %s5 = inlined_call_operand.vmem [shape: bf16[32,4], index: 5, kind: input, shape index: {}]
  %s6 = inlined_call_operand.vmem [shape: f32[1,4], index: 6, kind: input, shape index: {}]
  %s7 = inlined_call_operand.vmem [shape: f32[8,4], index: 7, kind: output, shape index: {}]
  %s8 = sld [smem:[#allocation0]]
  $region46: #{ffn_forward.1} parent=0
    _
  %s10 = ssub.s32 1, %s8
  %s11 = scalar_select 0, %s10, %s8
  $region1: #{ffn_forward.1} parent=0
    #allocation2 [shape = 'u8[4096]{0}', space=vmem, size = 0x1000, scoped, tag = 'input window, operand 0, single buffered']
    #allocation3 [shape = 's32[1]{0}', space=sflag, size = 0x4, scoped, tag = 'scoped memory for ffn_forward.1']
    #allocation4 [shape = 'u8[8192]{0}', space=vmem, size = 0x2000, scoped, tag = 'input window, operand 3, single buffered']
    #allocation5 [shape = 's32[1]{0}', space=sflag, size = 0x4, scoped, tag = 'scoped memory for ffn_forward.1']
    %12 = vsyncpa [#allocation3], 0
    %13 = vsyncpa [#allocation5], 0
    // Predicated region
    $region2: #{ffn_forward.1} parent=1 // pred_check
      _
    $region3: #{ffn_forward.1} parent=1 // pred_check_branch
      %15 = sbr.rel (0) target = $region5
    $region4: #{ffn_forward.1} parent=1 // pred_region
      %s17 = ssub.s32 128, 128
      %18 = vsyncadd [#allocation3], %s17
      %s20 = sshll.u32 [#allocation2], 4
      %s21 = int_to_ptr.vmem [resolvable:$true] %s20
      %23 = dma.hbm_to_vmem [thread:$0]  %s0, 128, %s21, [#allocation3]
    $region5: #{ffn_forward.1} parent=1 // pred_fallthru
      _
    // Predicated region
    $region6: #{ffn_forward.1} parent=1 // pred_check
      _
    $region7: #{ffn_forward.1} parent=1 // pred_check_branch
      %25 = sbr.rel (0) target = $region9
    $region8: #{ffn_forward.1} parent=1 // pred_region
      _
    $region9: #{ffn_forward.1} parent=1 // pred_fallthru
      _
    // Predicated region
    $region10: #{ffn_forward.1} parent=1 // pred_check
      _
    $region11: #{ffn_forward.1} parent=1 // pred_check_branch
      %27 = sbr.rel (0) target = $region13
    $region12: #{ffn_forward.1} parent=1 // pred_region
      _
    $region13: #{ffn_forward.1} parent=1 // pred_fallthru
      _
    // Predicated region
    $region14: #{ffn_forward.1} parent=1 // pred_check
      _
    $region15: #{ffn_forward.1} parent=1 // pred_check_branch
      %29 = sbr.rel (0) target = $region17
    $region16: #{ffn_forward.1} parent=1 // pred_region
      %s31 = ssub.s32 256, 256
      %32 = vsyncadd [#allocation5], %s31
      %s33 = sshll.u32 [#allocation4], 4
      %s34 = int_to_ptr.vmem [resolvable:$true] %s33
      %39 = dma.hbm_to_vmem [thread:$0]  %s3, 256, %s34, [#allocation5], 64, 64, 4
    $region17: #{ffn_forward.1} parent=1 // pred_fallthru
      _
    // Predicated region
    $region18: #{ffn_forward.1} parent=1 // pred_check
      _
    $region19: #{ffn_forward.1} parent=1 // pred_check_branch
      %41 = sbr.rel (0) target = $region21
    $region20: #{ffn_forward.1} parent=1 // pred_region
      _
    $region21: #{ffn_forward.1} parent=1 // pred_fallthru
      _
    // Predicated region
    $region22: #{ffn_forward.1} parent=1 // pred_check
      _
    $region23: #{ffn_forward.1} parent=1 // pred_check_branch
      %43 = sbr.rel (0) target = $region25
    $region24: #{ffn_forward.1} parent=1 // pred_region
      _
    $region25: #{ffn_forward.1} parent=1 // pred_fallthru
      _
    // Predicated region
    $region26: #{ffn_forward.1} parent=1 // pred_check
      _
    $region27: #{ffn_forward.1} parent=1 // pred_check_branch
      %45 = sbr.rel (0) target = $region29
    $region28: #{ffn_forward.1} parent=1 // pred_region
      _
    $region29: #{ffn_forward.1} parent=1 // pred_fallthru
      _
    // Predicated region
    $region30: #{ffn_forward.1} parent=1 // pred_check
      _
    $region31: #{ffn_forward.1} parent=1 // pred_check_branch
      %47 = sbr.rel (0) target = $region33
    $region32: #{ffn_forward.1} parent=1 // pred_region
      %48 = dma.done [#allocation3], 128
    $region33: #{ffn_forward.1} parent=1 // pred_fallthru
      _
    // Predicated region
    $region34: #{ffn_forward.1} parent=1 // pred_check
      _
    $region35: #{ffn_forward.1} parent=1 // pred_check_branch
      %50 = sbr.rel (0) target = $region37
    $region36: #{ffn_forward.1} parent=1 // pred_region
      %51 = dma.done [#allocation5], 256
    $region37: #{ffn_forward.1} parent=1 // pred_fallthru
      _
    %v53 = vld [vmem:[#allocation2] sm:$0xff]
    %v54 = vpack.c.bf16 %v53, %v53
    %v55 = vld [vmem:[%s1] sm:$0xf]
    %v56 = vld [vmem:[%s1 + $0x4] sm:$0xf]
    %v57 = vld [vmem:[%s1 + $0x8] sm:$0xf]
    %v58 = vld [vmem:[%s1 + $0xc] sm:$0xf]
    %v59 = vld [vmem:[%s2] sm:$0x1]
    %v61 = vlaneseq
    %v62 = vshrl.u32 %v61, 7
    %v63 = vsub.s32 0, %v62
    %v64 = vrot.slane %v59, %v63
    %v70 = vunpack.c.l.b16 %v55
    %v71 = vunpack.c.l.b16 %v56
    %v72 = vunpack.c.l.b16 %v57
    %v73 = vunpack.c.l.b16 %v58
    %v74 = vpack.c.b16 %v71, %v70
    %v75 = vpack.c.b16 %v73, %v72
    %vm78 = vcmask 261120
    %v80 = vsel %vm78, %v54, 0
    %82 = vmatprep.subr.bf16.mxu0 0
    %83 = vmatpush1.bf16.msra.mxu0 %v74
    %84 = vmatprep.subr.bf16.mxu0 0
    %85 = vmatpush1.bf16.msra.mxu0 %v75
    %86 = vmatprep.subr.bf16.mxu0 0
    %87 = vmatpush1.bf16.msra.mxu0 0
    %88 = vmatprep.subr.bf16.mxu0 0
    %89 = vmatpush1.bf16.msra.mxu0 0
    %90 = vmatprep.subr.bf16.mxu0 0
    %91 = vmatpush1.bf16.msra.mxu0 0
    %92 = vmatprep.subr.bf16.mxu0 0
    %93 = vmatpush1.bf16.msra.mxu0 0
    %94 = vmatprep.subr.bf16.mxu0 0
    %95 = vmatpush1.bf16.msra.mxu0 0
    %96 = vmatprep.subr.bf16.mxu0 0
    %97 = vmatpush1.bf16.msra.mxu0 0
    %98 = vmatprep.subr.bf16.mxu0 0
    %99 = vmatpush1.bf16.msra.mxu0 0
    %100 = vmatprep.subr.bf16.mxu0 0
    %101 = vmatpush1.bf16.msra.mxu0 0
    %102 = vmatprep.subr.bf16.mxu0 0
    %103 = vmatpush1.bf16.msra.mxu0 0
    %104 = vmatprep.subr.bf16.mxu0 0
    %105 = vmatpush1.bf16.msra.mxu0 0
    %106 = vmatprep.subr.bf16.mxu0 0
    %107 = vmatpush1.bf16.msra.mxu0 0
    %108 = vmatprep.subr.bf16.mxu0 0
    %109 = vmatpush1.bf16.msra.mxu0 0
    %110 = vmatprep.subr.bf16.mxu0 0
    %111 = vmatpush1.bf16.msra.mxu0 0
    %112 = vmatprep.subr.bf16.mxu0 0
    %113 = vmatpush1.bf16.msra.mxu0 0
    %114 = vmatprep.mubr.bf16.mxu0 0
    %115 = vmatmul.mubr.bf16.gmra.mrb[0].mxu0 %v80
    %v116 = vpop.f32.mrb[0].mxu0
    %v117 = vadd.f32 %v64, %v116
    %v118 = vpop.f32.mrb[0].mxu0
    %v119 = vpop.f32.mrb[0].mxu0
    %v120 = vpop.f32.mrb[0].mxu0
    %121 = vdwg.mxu0
    %v122 = vmax.f32 %v117, 0.0
    %v123 = vpack.c.bf16 %v122, %v122
    %v124 = vld [vmem:[#allocation4] sm:$0xf]
    %v125 = vld [vmem:[#allocation4 + $0x4] sm:$0xf]
    %v126 = vld [vmem:[#allocation4 + $0x8] sm:$0xf]
    %v127 = vld [vmem:[#allocation4 + $0xc] sm:$0xf]
    %v128 = vld [vmem:[%s4] sm:$0x1]
    %v130 = vlaneseq
    %v131 = vshrl.u32 %v130, 7
    %v132 = vsub.s32 0, %v131
    %v133 = vrot.slane %v128, %v132
    %v139 = vunpack.c.l.b16 %v124
    %v140 = vunpack.c.l.b16 %v125
    %v141 = vunpack.c.l.b16 %v126
    %v142 = vunpack.c.l.b16 %v127
    %v143 = vpack.c.b16 %v140, %v139
    %v144 = vpack.c.b16 %v142, %v141
    %v148 = vsel %vm78, %v123, 0
    %150 = vmatprep.subr.bf16.mxu0 0
    %151 = vmatpush1.bf16.msra.mxu0 %v143
    %152 = vmatprep.subr.bf16.mxu0 0
    %153 = vmatpush1.bf16.msra.mxu0 %v144
    %154 = vmatprep.subr.bf16.mxu0 0
    %155 = vmatpush1.bf16.msra.mxu0 0
    %156 = vmatprep.subr.bf16.mxu0 0
    %157 = vmatpush1.bf16.msra.mxu0 0
    %158 = vmatprep.subr.bf16.mxu0 0
    %159 = vmatpush1.bf16.msra.mxu0 0
    %160 = vmatprep.subr.bf16.mxu0 0
    %161 = vmatpush1.bf16.msra.mxu0 0
    %162 = vmatprep.subr.bf16.mxu0 0
    %163 = vmatpush1.bf16.msra.mxu0 0
    %164 = vmatprep.subr.bf16.mxu0 0
    %165 = vmatpush1.bf16.msra.mxu0 0
    %166 = vmatprep.subr.bf16.mxu0 0
    %167 = vmatpush1.bf16.msra.mxu0 0
    %168 = vmatprep.subr.bf16.mxu0 0
    %169 = vmatpush1.bf16.msra.mxu0 0
    %170 = vmatprep.subr.bf16.mxu0 0
    %171 = vmatpush1.bf16.msra.mxu0 0
    %172 = vmatprep.subr.bf16.mxu0 0
    %173 = vmatpush1.bf16.msra.mxu0 0
    %174 = vmatprep.subr.bf16.mxu0 0
    %175 = vmatpush1.bf16.msra.mxu0 0
    %176 = vmatprep.subr.bf16.mxu0 0
    %177 = vmatpush1.bf16.msra.mxu0 0
    %178 = vmatprep.subr.bf16.mxu0 0
    %179 = vmatpush1.bf16.msra.mxu0 0
    %180 = vmatprep.subr.bf16.mxu0 0
    %181 = vmatpush1.bf16.msra.mxu0 0
    %182 = vmatprep.mubr.bf16.mxu0 0
    %183 = vmatmul.mubr.bf16.gmra.mrb[0].mxu0 %v148
    %v184 = vpop.f32.mrb[0].mxu0
    %v185 = vadd.f32 %v133, %v184
    %v186 = vpop.f32.mrb[0].mxu0
    %v187 = vpop.f32.mrb[0].mxu0
    %v188 = vpop.f32.mrb[0].mxu0
    %189 = vdwg.mxu0
    %v190 = vmax.f32 %v185, 0.0
    %v191 = vpack.c.bf16 %v190, %v190
    %v192 = vld [vmem:[%s5] sm:$0xf]
    %v193 = vld [vmem:[%s5 + $0x4] sm:$0xf]
    %v194 = vld [vmem:[%s5 + $0x8] sm:$0xf]
    %v195 = vld [vmem:[%s5 + $0xc] sm:$0xf]
    %v196 = vld [vmem:[%s6] sm:$0x1]
    %v198 = vlaneseq
    %v199 = vshrl.u32 %v198, 7
    %v200 = vsub.s32 0, %v199
    %v201 = vrot.slane %v196, %v200
    %v207 = vunpack.c.l.b16 %v192
    %v208 = vunpack.c.l.b16 %v193
    %v209 = vunpack.c.l.b16 %v194
    %v210 = vunpack.c.l.b16 %v195
    %v211 = vpack.c.b16 %v208, %v207
    %v212 = vpack.c.b16 %v210, %v209
    %v216 = vsel %vm78, %v191, 0
    %218 = vmatprep.subr.bf16.mxu0 0
    %219 = vmatpush1.bf16.msra.mxu0 %v211
    %220 = vmatprep.subr.bf16.mxu0 0
    %221 = vmatpush1.bf16.msra.mxu0 %v212
    %222 = vmatprep.subr.bf16.mxu0 0
    %223 = vmatpush1.bf16.msra.mxu0 0
    %224 = vmatprep.subr.bf16.mxu0 0
    %225 = vmatpush1.bf16.msra.mxu0 0
    %226 = vmatprep.subr.bf16.mxu0 0
    %227 = vmatpush1.bf16.msra.mxu0 0
    %228 = vmatprep.subr.bf16.mxu0 0
    %229 = vmatpush1.bf16.msra.mxu0 0
    %230 = vmatprep.subr.bf16.mxu0 0
    %231 = vmatpush1.bf16.msra.mxu0 0
    %232 = vmatprep.subr.bf16.mxu0 0
    %233 = vmatpush1.bf16.msra.mxu0 0
    %234 = vmatprep.subr.bf16.mxu0 0
    %235 = vmatpush1.bf16.msra.mxu0 0
    %236 = vmatprep.subr.bf16.mxu0 0
    %237 = vmatpush1.bf16.msra.mxu0 0
    %238 = vmatprep.subr.bf16.mxu0 0
    %239 = vmatpush1.bf16.msra.mxu0 0
    %240 = vmatprep.subr.bf16.mxu0 0
    %241 = vmatpush1.bf16.msra.mxu0 0
    %242 = vmatprep.subr.bf16.mxu0 0
    %243 = vmatpush1.bf16.msra.mxu0 0
    %244 = vmatprep.subr.bf16.mxu0 0
    %245 = vmatpush1.bf16.msra.mxu0 0
    %246 = vmatprep.subr.bf16.mxu0 0
    %247 = vmatpush1.bf16.msra.mxu0 0
    %248 = vmatprep.subr.bf16.mxu0 0
    %249 = vmatpush1.bf16.msra.mxu0 0
    %250 = vmatprep.mubr.bf16.mxu0 0
    %251 = vmatmul.mubr.bf16.gmra.mrb[0].mxu0 %v216
    %v252 = vpop.f32.mrb[0].mxu0
    %v253 = vadd.f32 %v201, %v252
    %v254 = vpop.f32.mrb[0].mxu0
    %v255 = vpop.f32.mrb[0].mxu0
    %v256 = vpop.f32.mrb[0].mxu0
    %257 = vdwg.mxu0
    %vm258 = vcmask 31744
    %259 = vst.msk [vmem:[%s7] sm:$0xff] %vm258, %v253
    // Predicated region
    $region38: #{ffn_forward.1} parent=1 // pred_check
      _
    $region39: #{ffn_forward.1} parent=1 // pred_check_branch
      %261 = sbr.rel (0) target = $region41
    $region40: #{ffn_forward.1} parent=1 // pred_region
      _
    $region41: #{ffn_forward.1} parent=1 // pred_fallthru
      _
    // Predicated region
    $region42: #{ffn_forward.1} parent=1 // pred_check
      _
    $region43: #{ffn_forward.1} parent=1 // pred_check_branch
      %263 = sbr.rel (0) target = $region45
    $region44: #{ffn_forward.1} parent=1 // pred_region
      _
    $region45: #{ffn_forward.1} parent=1 // pred_fallthru
      _
    %264 = vsyncpa [#allocation3], 1
    %265 = vsyncpa [#allocation5], 1

// kernel: ffn_forward.1
$region0: #{ffn_forward.1}
  #allocation0 [shape = 'u32[]', space=smem, size = 0x4, offset = 0x4, fixed_abs, tag = 'smem constant byte address 0x4 - core index']
  #allocation1 [shape = 'u32[144,128]{1,0:T(1,128)}', space=vmem, size = 0x12000, scoped, tag = 'internal scratch']
  %s0 = inlined_call_operand.hbm [shape: f32[8,32], index: 0, kind: input, shape index: {}]
  %s1 = inlined_call_operand.vmem [shape: bf16[32,32], index: 1, kind: input, shape index: {}]
  %s2 = inlined_call_operand.vmem [shape: f32[1,32], index: 2, kind: input, shape index: {}]
  %s3 = inlined_call_operand.hbm [shape: bf16[32,32], index: 3, kind: input, shape index: {}]
  %s4 = inlined_call_operand.vmem [shape: f32[1,32], index: 4, kind: input, shape index: {}]
  %s5 = inlined_call_operand.vmem [shape: bf16[32,4], index: 5, kind: input, shape index: {}]
  %s6 = inlined_call_operand.vmem [shape: f32[1,4], index: 6, kind: input, shape index: {}]
  %s7 = inlined_call_operand.vmem [shape: f32[8,4], index: 7, kind: output, shape index: {}]
  %s8 = sld [smem:[#allocation0]]
  $region46: #{ffn_forward.1} parent=0
    _
  %s10 = ssub.s32 1, %s8
  %s11 = scalar_select 0, %s10, %s8
  $region1: #{ffn_forward.1} parent=0
    #allocation2 [shape = 'u8[4096]{0}', space=vmem, size = 0x1000, scoped, tag = 'input window, operand 0, single buffered']
    #allocation3 [shape = 's32[1]{0}', space=sflag, size = 0x4, scoped, tag = 'scoped memory for ffn_forward.1']
    #allocation4 [shape = 'u8[8192]{0}', space=vmem, size = 0x2000, scoped, tag = 'input window, operand 3, single buffered']
    #allocation5 [shape = 's32[1]{0}', space=sflag, size = 0x4, scoped, tag = 'scoped memory for ffn_forward.1']
    %12 = vsyncpa [#allocation3], 0
    %13 = vsyncpa [#allocation5], 0
    // Predicated region
    $region2: #{ffn_forward.1} parent=1 // pred_check
      _
    $region3: #{ffn_forward.1} parent=1 // pred_check_branch
      %15 = sbr.rel (0) target = $region5
    $region4: #{ffn_forward.1} parent=1 // pred_region
      %s17 = ssub.s32 128, 128
      %18 = vsyncadd [#allocation3], %s17
      %s20 = sshll.u32 [#allocation2], 4
      %s21 = int_to_ptr.vmem [resolvable:$true] %s20
      %23 = dma.hbm_to_vmem [thread:$0]  %s0, 128, %s21, [#allocation3]
    $region5: #{ffn_forward.1} parent=1 // pred_fallthru
      _
    // Predicated region
    $region6: #{ffn_forward.1} parent=1 // pred_check
      _
    $region7: #{ffn_forward.1} parent=1 // pred_check_branch
      %25 = sbr.rel (0) target = $region9
    $region8: #{ffn_forward.1} parent=1 // pred_region
      _
    $region9: #{ffn_forward.1} parent=1 // pred_fallthru
      _
    // Predicated region
    $region10: #{ffn_forward.1} parent=1 // pred_check
      _
    $region11: #{ffn_forward.1} parent=1 // pred_check_branch
      %27 = sbr.rel (0) target = $region13
    $region12: #{ffn_forward.1} parent=1 // pred_region
      _
    $region13: #{ffn_forward.1} parent=1 // pred_fallthru
      _
    // Predicated region
    $region14: #{ffn_forward.1} parent=1 // pred_check
      _
    $region15: #{ffn_forward.1} parent=1 // pred_check_branch
      %29 = sbr.rel (0) target = $region17
    $region16: #{ffn_forward.1} parent=1 // pred_region
      %s31 = ssub.s32 256, 256
      %32 = vsyncadd [#allocation5], %s31
      %s33 = sshll.u32 [#allocation4], 4
      %s34 = int_to_ptr.vmem [resolvable:$true] %s33
      %39 = dma.hbm_to_vmem [thread:$0]  %s3, 256, %s34, [#allocation5], 64, 64, 4
    $region17: #{ffn_forward.1} parent=1 // pred_fallthru
      _
    // Predicated region
    $region18: #{ffn_forward.1} parent=1 // pred_check
      _
    $region19: #{ffn_forward.1} parent=1 // pred_check_branch
      %41 = sbr.rel (0) target = $region21
    $region20: #{ffn_forward.1} parent=1 // pred_region
      _
    $region21: #{ffn_forward.1} parent=1 // pred_fallthru
      _
    // Predicated region
    $region22: #{ffn_forward.1} parent=1 // pred_check
      _
    $region23: #{ffn_forward.1} parent=1 // pred_check_branch
      %43 = sbr.rel (0) target = $region25
    $region24: #{ffn_forward.1} parent=1 // pred_region
      _
    $region25: #{ffn_forward.1} parent=1 // pred_fallthru
      _
    // Predicated region
    $region26: #{ffn_forward.1} parent=1 // pred_check
      _
    $region27: #{ffn_forward.1} parent=1 // pred_check_branch
      %45 = sbr.rel (0) target = $region29
    $region28: #{ffn_forward.1} parent=1 // pred_region
      _
    $region29: #{ffn_forward.1} parent=1 // pred_fallthru
      _
    // Predicated region
    $region30: #{ffn_forward.1} parent=1 // pred_check
      _
    $region31: #{ffn_forward.1} parent=1 // pred_check_branch
      %47 = sbr.rel (0) target = $region33
    $region32: #{ffn_forward.1} parent=1 // pred_region
      %48 = dma.done [#allocation3], 128
    $region33: #{ffn_forward.1} parent=1 // pred_fallthru
      _
    // Predicated region
    $region34: #{ffn_forward.1} parent=1 // pred_check
      _
    $region35: #{ffn_forward.1} parent=1 // pred_check_branch
      %50 = sbr.rel (0) target = $region37
    $region36: #{ffn_forward.1} parent=1 // pred_region
      %51 = dma.done [#allocation5], 256
    $region37: #{ffn_forward.1} parent=1 // pred_fallthru
      _
    %v53 = vld [vmem:[#allocation2] sm:$0xff]
    %v54 = vpack.c.bf16 %v53, %v53
    %v55 = vld [vmem:[%s1] sm:$0xf]
    %v56 = vld [vmem:[%s1 + $0x4] sm:$0xf]
    %v57 = vld [vmem:[%s1 + $0x8] sm:$0xf]
    %v58 = vld [vmem:[%s1 + $0xc] sm:$0xf]
    %v59 = vld [vmem:[%s2] sm:$0x1]
    %v61 = vlaneseq
    %v62 = vshrl.u32 %v61, 7
    %v63 = vsub.s32 0, %v62
    %v64 = vrot.slane %v59, %v63
    %v70 = vunpack.c.l.b16 %v55
    %v71 = vunpack.c.l.b16 %v56
    %v72 = vunpack.c.l.b16 %v57
    %v73 = vunpack.c.l.b16 %v58
    %v74 = vpack.c.b16 %v71, %v70
    %v75 = vpack.c.b16 %v73, %v72
    %vm78 = vcmask 261120
    %v80 = vsel %vm78, %v54, 0
    %82 = vmatprep.subr.bf16.mxu0 0
    %83 = vmatpush1.bf16.msra.mxu0 %v74
    %84 = vmatprep.subr.bf16.mxu0 0
    %85 = vmatpush1.bf16.msra.mxu0 %v75
    %86 = vmatprep.subr.bf16.mxu0 0
    %87 = vmatpush1.bf16.msra.mxu0 0
    %88 = vmatprep.subr.bf16.mxu0 0
    %89 = vmatpush1.bf16.msra.mxu0 0
    %90 = vmatprep.subr.bf16.mxu0 0
    %91 = vmatpush1.bf16.msra.mxu0 0
    %92 = vmatprep.subr.bf16.mxu0 0
    %93 = vmatpush1.bf16.msra.mxu0 0
    %94 = vmatprep.subr.bf16.mxu0 0
    %95 = vmatpush1.bf16.msra.mxu0 0
    %96 = vmatprep.subr.bf16.mxu0 0
    %97 = vmatpush1.bf16.msra.mxu0 0
    %98 = vmatprep.subr.bf16.mxu0 0
    %99 = vmatpush1.bf16.msra.mxu0 0
    %100 = vmatprep.subr.bf16.mxu0 0
    %101 = vmatpush1.bf16.msra.mxu0 0
    %102 = vmatprep.subr.bf16.mxu0 0
    %103 = vmatpush1.bf16.msra.mxu0 0
    %104 = vmatprep.subr.bf16.mxu0 0
    %105 = vmatpush1.bf16.msra.mxu0 0
    %106 = vmatprep.subr.bf16.mxu0 0
    %107 = vmatpush1.bf16.msra.mxu0 0
    %108 = vmatprep.subr.bf16.mxu0 0
    %109 = vmatpush1.bf16.msra.mxu0 0
    %110 = vmatprep.subr.bf16.mxu0 0
    %111 = vmatpush1.bf16.msra.mxu0 0
    %112 = vmatprep.subr.bf16.mxu0 0
    %113 = vmatpush1.bf16.msra.mxu0 0
    %114 = vmatprep.mubr.bf16.mxu0 0
    %115 = vmatmul.mubr.bf16.gmra.mrb[0].mxu0 %v80
    %v116 = vpop.f32.mrb[0].mxu0
    %v117 = vadd.f32 %v64, %v116
    %v118 = vpop.f32.mrb[0].mxu0
    %v119 = vpop.f32.mrb[0].mxu0
    %v120 = vpop.f32.mrb[0].mxu0
    %121 = vdwg.mxu0
    %v122 = vmax.f32 %v117, 0.0
    %v123 = vpack.c.bf16 %v122, %v122
    %v124 = vld [vmem:[#allocation4] sm:$0xf]
    %v125 = vld [vmem:[#allocation4 + $0x4] sm:$0xf]
    %v126 = vld [vmem:[#allocation4 + $0x8] sm:$0xf]
    %v127 = vld [vmem:[#allocation4 + $0xc] sm:$0xf]
    %v128 = vld [vmem:[%s4] sm:$0x1]
    %v130 = vlaneseq
    %v131 = vshrl.u32 %v130, 7
    %v132 = vsub.s32 0, %v131
    %v133 = vrot.slane %v128, %v132
    %v139 = vunpack.c.l.b16 %v124
    %v140 = vunpack.c.l.b16 %v125
    %v141 = vunpack.c.l.b16 %v126
    %v142 = vunpack.c.l.b16 %v127
    %v143 = vpack.c.b16 %v140, %v139
    %v144 = vpack.c.b16 %v142, %v141
    %v148 = vsel %vm78, %v123, 0
    %150 = vmatprep.subr.bf16.mxu0 0
    %151 = vmatpush1.bf16.msra.mxu0 %v143
    %152 = vmatprep.subr.bf16.mxu0 0
    %153 = vmatpush1.bf16.msra.mxu0 %v144
    %154 = vmatprep.subr.bf16.mxu0 0
    %155 = vmatpush1.bf16.msra.mxu0 0
    %156 = vmatprep.subr.bf16.mxu0 0
    %157 = vmatpush1.bf16.msra.mxu0 0
    %158 = vmatprep.subr.bf16.mxu0 0
    %159 = vmatpush1.bf16.msra.mxu0 0
    %160 = vmatprep.subr.bf16.mxu0 0
    %161 = vmatpush1.bf16.msra.mxu0 0
    %162 = vmatprep.subr.bf16.mxu0 0
    %163 = vmatpush1.bf16.msra.mxu0 0
    %164 = vmatprep.subr.bf16.mxu0 0
    %165 = vmatpush1.bf16.msra.mxu0 0
    %166 = vmatprep.subr.bf16.mxu0 0
    %167 = vmatpush1.bf16.msra.mxu0 0
    %168 = vmatprep.subr.bf16.mxu0 0
    %169 = vmatpush1.bf16.msra.mxu0 0
    %170 = vmatprep.subr.bf16.mxu0 0
    %171 = vmatpush1.bf16.msra.mxu0 0
    %172 = vmatprep.subr.bf16.mxu0 0
    %173 = vmatpush1.bf16.msra.mxu0 0
    %174 = vmatprep.subr.bf16.mxu0 0
    %175 = vmatpush1.bf16.msra.mxu0 0
    %176 = vmatprep.subr.bf16.mxu0 0
    %177 = vmatpush1.bf16.msra.mxu0 0
    %178 = vmatprep.subr.bf16.mxu0 0
    %179 = vmatpush1.bf16.msra.mxu0 0
    %180 = vmatprep.subr.bf16.mxu0 0
    %181 = vmatpush1.bf16.msra.mxu0 0
    %182 = vmatprep.mubr.bf16.mxu0 0
    %183 = vmatmul.mubr.bf16.gmra.mrb[0].mxu0 %v148
    %v184 = vpop.f32.mrb[0].mxu0
    %v185 = vadd.f32 %v133, %v184
    %v186 = vpop.f32.mrb[0].mxu0
    %v187 = vpop.f32.mrb[0].mxu0
    %v188 = vpop.f32.mrb[0].mxu0
    %189 = vdwg.mxu0
    %v190 = vmax.f32 %v185, 0.0
    %v191 = vpack.c.bf16 %v190, %v190
    %v192 = vld [vmem:[%s5] sm:$0xf]
    %v193 = vld [vmem:[%s5 + $0x4] sm:$0xf]
    %v194 = vld [vmem:[%s5 + $0x8] sm:$0xf]
    %v195 = vld [vmem:[%s5 + $0xc] sm:$0xf]
    %v196 = vld [vmem:[%s6] sm:$0x1]
    %v198 = vlaneseq
    %v199 = vshrl.u32 %v198, 7
    %v200 = vsub.s32 0, %v199
    %v201 = vrot.slane %v196, %v200
    %v207 = vunpack.c.l.b16 %v192
    %v208 = vunpack.c.l.b16 %v193
    %v209 = vunpack.c.l.b16 %v194
    %v210 = vunpack.c.l.b16 %v195
    %v211 = vpack.c.b16 %v208, %v207
    %v212 = vpack.c.b16 %v210, %v209
    %v216 = vsel %vm78, %v191, 0
    %218 = vmatprep.subr.bf16.mxu0 0
    %219 = vmatpush1.bf16.msra.mxu0 %v211
    %220 = vmatprep.subr.bf16.mxu0 0
    %221 = vmatpush1.bf16.msra.mxu0 %v212
    %222 = vmatprep.subr.bf16.mxu0 0
    %223 = vmatpush1.bf16.msra.mxu0 0
    %224 = vmatprep.subr.bf16.mxu0 0
    %225 = vmatpush1.bf16.msra.mxu0 0
    %226 = vmatprep.subr.bf16.mxu0 0
    %227 = vmatpush1.bf16.msra.mxu0 0
    %228 = vmatprep.subr.bf16.mxu0 0
    %229 = vmatpush1.bf16.msra.mxu0 0
    %230 = vmatprep.subr.bf16.mxu0 0
    %231 = vmatpush1.bf16.msra.mxu0 0
    %232 = vmatprep.subr.bf16.mxu0 0
    %233 = vmatpush1.bf16.msra.mxu0 0
    %234 = vmatprep.subr.bf16.mxu0 0
    %235 = vmatpush1.bf16.msra.mxu0 0
    %236 = vmatprep.subr.bf16.mxu0 0
    %237 = vmatpush1.bf16.msra.mxu0 0
    %238 = vmatprep.subr.bf16.mxu0 0
    %239 = vmatpush1.bf16.msra.mxu0 0
    %240 = vmatprep.subr.bf16.mxu0 0
    %241 = vmatpush1.bf16.msra.mxu0 0
    %242 = vmatprep.subr.bf16.mxu0 0
    %243 = vmatpush1.bf16.msra.mxu0 0
    %244 = vmatprep.subr.bf16.mxu0 0
    %245 = vmatpush1.bf16.msra.mxu0 0
    %246 = vmatprep.subr.bf16.mxu0 0
    %247 = vmatpush1.bf16.msra.mxu0 0
    %248 = vmatprep.subr.bf16.mxu0 0
    %249 = vmatpush1.bf16.msra.mxu0 0
    %250 = vmatprep.mubr.bf16.mxu0 0
    %251 = vmatmul.mubr.bf16.gmra.mrb[0].mxu0 %v216
    %v252 = vpop.f32.mrb[0].mxu0
    %v253 = vadd.f32 %v201, %v252
    %v254 = vpop.f32.mrb[0].mxu0
    %v255 = vpop.f32.mrb[0].mxu0
    %v256 = vpop.f32.mrb[0].mxu0
    %257 = vdwg.mxu0
    %vm258 = vcmask 31744
    %259 = vst.msk [vmem:[%s7] sm:$0xff] %vm258, %v253
    // Predicated region
    $region38: #{ffn_forward.1} parent=1 // pred_check
      _
    $region39: #{ffn_forward.1} parent=1 // pred_check_branch
      %261 = sbr.rel (0) target = $region41
    $region40: #{ffn_forward.1} parent=1 // pred_region
      _
    $region41: #{ffn_forward.1} parent=1 // pred_fallthru
      _
    // Predicated region
    $region42: #{ffn_forward.1} parent=1 // pred_check
      _
    $region43: #{ffn_forward.1} parent=1 // pred_check_branch
      %263 = sbr.rel (0) target = $region45
    $region44: #{ffn_forward.1} parent=1 // pred_region
      _
    $region45: #{ffn_forward.1} parent=1 // pred_fallthru
      _
    %264 = vsyncpa [#allocation3], 1
    %265 = vsyncpa [#allocation5], 1

</llo_original>
